<compile_context>
chip_gen: v6e
topology: v6e:2x2x1
jax: 0.10.0
libtpu: 0.0.40
codegen_flags: <defaults>
</compile_context>

<pallas_src>
import functools

import jax
import jax.numpy as jnp
from jax import lax
from jax.experimental import pallas as pl
from jax.experimental.pallas import tpu as pltpu

LN_EPS = 1e-12  # BertLayerNorm eps


def _round_up(x, m):
    return ((x + m - 1) // m) * m


def _bert_embeddings_kernel(wid_ref, pid_ref, tid_ref,
                            word_ref, pos_ref, type_ref,
                            gamma_ref, beta_ref, o_ref):
    tb = wid_ref.shape[0]

    def onehot_lookup(ids2d, table_ref):
        n = table_ref.shape[0]
        iota = lax.broadcasted_iota(jnp.int32, (tb, n), 1)
        onehot = (ids2d == iota).astype(jnp.float32)          # (tb, n)
        return jnp.dot(onehot, table_ref[...].astype(jnp.float32),
                       preferred_element_type=jnp.float32)    # (tb, H)

    # Sum of the three embedding lookups.
    emb = onehot_lookup(wid_ref[...], word_ref)
    emb = emb + onehot_lookup(pid_ref[...], pos_ref)
    emb = emb + onehot_lookup(tid_ref[...], type_ref)

    # LayerNorm over the hidden dim (biased variance, eps=1e-12, like PyTorch).
    mean = jnp.mean(emb, axis=-1, keepdims=True)
    centered = emb - mean
    var = jnp.mean(centered * centered, axis=-1, keepdims=True)
    xn = centered * lax.rsqrt(var + LN_EPS)
    out = xn * gamma_ref[...] + beta_ref[...]

    # Dropout is identity at inference time.
    o_ref[...] = out.astype(o_ref.dtype)


@functools.partial(jax.jit, static_argnames=("block_t", "vmem_limit_bytes"))
def bert_embeddings(input_ids, token_type_ids, params,
                    block_t=256, vmem_limit_bytes=None):
    """input_ids, token_type_ids: (B, S) int32. Returns (B, S, H) float32."""
    word_tbl, pos_tbl, type_tbl, gamma, beta = params
    B, S = input_ids.shape
    V, H = word_tbl.shape
    P = pos_tbl.shape[0]
    TV = type_tbl.shape[0]

    # position_ids = arange(S) broadcast over the batch (as in the PyTorch forward).
    position_ids = jnp.broadcast_to(
        jnp.arange(S, dtype=jnp.int32)[None, :], (B, S))

    # Flatten tokens to rows and pad to a tile-aligned count.
    T = B * S
    tb = min(int(block_t), _round_up(T, 8))
    tb = _round_up(tb, 8)
    T_pad = _round_up(T, tb)

    def prep_ids(ids):
        ids = ids.reshape(T).astype(jnp.int32)
        ids = jnp.pad(ids, (0, T_pad - T))          # padded rows use id 0
        return ids.reshape(T_pad, 1)

    wid = prep_ids(input_ids)
    pid = prep_ids(position_ids)
    tid = prep_ids(token_type_ids)

    grid = (T_pad // tb,)

    cost = pl.CostEstimate(
        flops=2 * T_pad * H * (V + P + TV) + 10 * T_pad * H,
        transcendentals=T_pad,
        bytes_accessed=4 * (3 * T_pad + (V + P + TV + 2) * H + T_pad * H),
    )

    out2d = pl.pallas_call(
        _bert_embeddings_kernel,
        out_shape=jax.ShapeDtypeStruct((T_pad, H), jnp.float32),
        grid_spec=pltpu.PrefetchScalarGridSpec(
            num_scalar_prefetch=0,
            grid=grid,
            in_specs=[
                pl.BlockSpec((tb, 1), lambda i: (i, 0)),   # word ids
                pl.BlockSpec((tb, 1), lambda i: (i, 0)),   # position ids
                pl.BlockSpec((tb, 1), lambda i: (i, 0)),   # token-type ids
                pl.BlockSpec((V, H), lambda i: (0, 0)),    # word table (VMEM-resident)
                pl.BlockSpec((P, H), lambda i: (0, 0)),    # position table
                pl.BlockSpec((TV, H), lambda i: (0, 0)),   # token-type table
                pl.BlockSpec((1, H), lambda i: (0, 0)),    # LayerNorm gamma
                pl.BlockSpec((1, H), lambda i: (0, 0)),    # LayerNorm beta
            ],
            out_specs=pl.BlockSpec((tb, H), lambda i: (i, 0)),
        ),
        compiler_params=pltpu.CompilerParams(
            dimension_semantics=("parallel",),
            vmem_limit_bytes=vmem_limit_bytes,
        ),
        cost_estimate=cost,
    )(wid, pid, tid, word_tbl, pos_tbl, type_tbl, gamma, beta)

    return out2d[:T].reshape(B, S, H)


def make_params(key, vocab_size, max_pos, type_vocab, hidden):
    k1, k2, k3 = jax.random.split(key, 3)
    word_tbl = jax.random.normal(k1, (vocab_size, hidden), jnp.float32) * 0.02
    word_tbl = word_tbl.at[0].set(0.0)   # padding_idx=0 row is zero
    pos_tbl = jax.random.normal(k2, (max_pos, hidden), jnp.float32) * 0.02
    type_tbl = jax.random.normal(k3, (type_vocab, hidden), jnp.float32) * 0.02
    gamma = jnp.ones((1, hidden), jnp.float32)
    beta = jnp.zeros((1, hidden), jnp.float32)
    return (word_tbl, pos_tbl, type_tbl, gamma, beta)


def reference(input_ids, token_type_ids, params):
    word_tbl, pos_tbl, type_tbl, gamma, beta = params
    B, S = input_ids.shape
    w = word_tbl[input_ids]
    p = pos_tbl[jnp.arange(S)][None, :, :]
    t = type_tbl[token_type_ids]
    e = w + p + t
    mean = jnp.mean(e, axis=-1, keepdims=True)
    var = jnp.mean((e - mean) ** 2, axis=-1, keepdims=True)
    return (e - mean) / jnp.sqrt(var + LN_EPS) * gamma + beta


if __name__ == "__main__":
    B, S, H = 2, 8, 128
    V, P, TV = 512, 64, 2

    key = jax.random.PRNGKey(0)
    k_ids, k_types, k_params = jax.random.split(key, 3)
    input_ids = jax.random.randint(k_ids, (B, S), 1, V, dtype=jnp.int32)
    token_type_ids = jax.random.randint(k_types, (B, S), 0, TV, dtype=jnp.int32)
    params = make_params(k_params, V, P, TV, H)

    out = bert_embeddings(input_ids, token_type_ids, params)
    out = jax.block_until_ready(out)

    ref = reference(input_ids, token_type_ids, params)
    assert out.shape == (B, S, H)
    assert jnp.allclose(out, ref, atol=1e-4, rtol=1e-4), (
        float(jnp.max(jnp.abs(out - ref))))
    print("KERNEL_OK")
</pallas_src>

<mosaic_0001>
module attributes {stable_mosaic.version = 11 : i64} {
  func.func @_bert_embeddings_kernel(%arg0: i32, %arg1: memref<16x1xi32, #tpu.memory_space<vmem>>, %arg2: memref<16x1xi32, #tpu.memory_space<vmem>>, %arg3: memref<16x1xi32, #tpu.memory_space<vmem>>, %arg4: memref<512x128xf32, #tpu.memory_space<vmem>>, %arg5: memref<64x128xf32, #tpu.memory_space<vmem>>, %arg6: memref<2x128xf32, #tpu.memory_space<vmem>>, %arg7: memref<1x128xf32, #tpu.memory_space<vmem>>, %arg8: memref<1x128xf32, #tpu.memory_space<vmem>>, %arg9: memref<16x128xf32, #tpu.memory_space<vmem>>) attributes {dimension_semantics = [#tpu.dimension_semantics<parallel>], iteration_bounds = array<i64: 1>, scalar_prefetch = 0 : i64, scratch_operands = 0 : i64, tpu.core_type = #tpu.core_type<tc>, window_params = [{transform_indices = @transform_0, window_bounds = array<i64: 16, 1>}, {transform_indices = @transform_1, window_bounds = array<i64: 16, 1>}, {transform_indices = @transform_2, window_bounds = array<i64: 16, 1>}, {pipeline_mode = #tpu.pipeline_mode<synchronous>, transform_indices = @transform_3, window_bounds = array<i64: 512, 128>}, {pipeline_mode = #tpu.pipeline_mode<synchronous>, transform_indices = @transform_4, window_bounds = array<i64: 64, 128>}, {pipeline_mode = #tpu.pipeline_mode<synchronous>, transform_indices = @transform_5, window_bounds = array<i64: 2, 128>}, {pipeline_mode = #tpu.pipeline_mode<synchronous>, transform_indices = @transform_6, window_bounds = array<i64: 1, 128>}, {pipeline_mode = #tpu.pipeline_mode<synchronous>, transform_indices = @transform_7, window_bounds = array<i64: 1, 128>}, {transform_indices = @transform_8, window_bounds = array<i64: 16, 128>}]} {
    %c0 = arith.constant 0 : index
    %c0_0 = arith.constant 0 : index
    %0 = vector.load %arg1[%c0, %c0_0] : memref<16x1xi32, #tpu.memory_space<vmem>>, vector<16x1xi32>
    %1 = tpu.iota {dimensions = array<i32: 1>} : vector<16x512xi32>
    %2 = vector.broadcast %0 : vector<16x1xi32> to vector<16x512xi32>
    %3 = arith.cmpi eq, %2, %1 : vector<16x512xi32>
    %4 = arith.extui %3 : vector<16x512xi1> to vector<16x512xi32>
    %5 = arith.sitofp %4 : vector<16x512xi32> to vector<16x512xf32>
    %c0_1 = arith.constant 0 : index
    %c0_2 = arith.constant 0 : index
    %6 = vector.load %arg4[%c0_1, %c0_2] : memref<512x128xf32, #tpu.memory_space<vmem>>, vector<512x128xf32>
    %cst = arith.constant dense<0.000000e+00> : vector<16x128xf32>
    %7 = tpu.matmul %5, %6, %cst {dimension_numbers = #tpu.dot_dimension_numbers<[1], [0], [0], [1], [0, 0, 1, 1], [], []>} : vector<16x512xf32>, vector<512x128xf32>, vector<16x128xf32> -> vector<16x128xf32>
    %c0_3 = arith.constant 0 : index
    %c0_4 = arith.constant 0 : index
    %8 = vector.load %arg2[%c0_3, %c0_4] : memref<16x1xi32, #tpu.memory_space<vmem>>, vector<16x1xi32>
    %9 = tpu.iota {dimensions = array<i32: 1>} : vector<16x64xi32>
    %10 = vector.broadcast %8 : vector<16x1xi32> to vector<16x64xi32>
    %11 = arith.cmpi eq, %10, %9 : vector<16x64xi32>
    %12 = arith.extui %11 : vector<16x64xi1> to vector<16x64xi32>
    %13 = arith.sitofp %12 : vector<16x64xi32> to vector<16x64xf32>
    %c0_5 = arith.constant 0 : index
    %c0_6 = arith.constant 0 : index
    %14 = vector.load %arg5[%c0_5, %c0_6] : memref<64x128xf32, #tpu.memory_space<vmem>>, vector<64x128xf32>
    %cst_7 = arith.constant dense<0.000000e+00> : vector<16x128xf32>
    %15 = tpu.matmul %13, %14, %cst_7 {dimension_numbers = #tpu.dot_dimension_numbers<[1], [0], [0], [1], [0, 0, 1, 1], [], []>} : vector<16x64xf32>, vector<64x128xf32>, vector<16x128xf32> -> vector<16x128xf32>
    %16 = arith.addf %7, %15 : vector<16x128xf32>
    %c0_8 = arith.constant 0 : index
    %c0_9 = arith.constant 0 : index
    %17 = vector.load %arg3[%c0_8, %c0_9] : memref<16x1xi32, #tpu.memory_space<vmem>>, vector<16x1xi32>
    %18 = tpu.iota {dimensions = array<i32: 1>} : vector<16x2xi32>
    %19 = vector.broadcast %17 : vector<16x1xi32> to vector<16x2xi32>
    %20 = arith.cmpi eq, %19, %18 : vector<16x2xi32>
    %21 = arith.extui %20 : vector<16x2xi1> to vector<16x2xi32>
    %22 = arith.sitofp %21 : vector<16x2xi32> to vector<16x2xf32>
    %c0_10 = arith.constant 0 : index
    %c0_11 = arith.constant 0 : index
    %23 = vector.load %arg6[%c0_10, %c0_11] : memref<2x128xf32, #tpu.memory_space<vmem>>, vector<2x128xf32>
    %cst_12 = arith.constant dense<0.000000e+00> : vector<16x128xf32>
    %24 = tpu.matmul %22, %23, %cst_12 {dimension_numbers = #tpu.dot_dimension_numbers<[1], [0], [0], [1], [0, 0, 1, 1], [], []>} : vector<16x2xf32>, vector<2x128xf32>, vector<16x128xf32> -> vector<16x128xf32>
    %25 = arith.addf %16, %24 : vector<16x128xf32>
    %cst_13 = arith.constant dense<0.000000e+00> : vector<16xf32>
    %26 = vector.multi_reduction <add>, %25, %cst_13 [1] : vector<16x128xf32> to vector<16xf32>
    %27 = vector.shape_cast %26 : vector<16xf32> to vector<16x1xf32>
    %cst_14 = arith.constant 1.280000e+02 : f32
    %28 = vector.broadcast %cst_14 : f32 to vector<16x1xf32>
    %29 = arith.divf %27, %28 : vector<16x1xf32>
    %30 = vector.broadcast %29 : vector<16x1xf32> to vector<16x128xf32>
    %31 = arith.subf %25, %30 : vector<16x128xf32>
    %32 = arith.mulf %31, %31 : vector<16x128xf32>
    %cst_15 = arith.constant dense<0.000000e+00> : vector<16xf32>
    %33 = vector.multi_reduction <add>, %32, %cst_15 [1] : vector<16x128xf32> to vector<16xf32>
    %34 = vector.shape_cast %33 : vector<16xf32> to vector<16x1xf32>
    %cst_16 = arith.constant 1.280000e+02 : f32
    %35 = vector.broadcast %cst_16 : f32 to vector<16x1xf32>
    %36 = arith.divf %34, %35 : vector<16x1xf32>
    %cst_17 = arith.constant 9.99999996E-13 : f32
    %37 = vector.broadcast %cst_17 : f32 to vector<16x1xf32>
    %38 = arith.addf %36, %37 : vector<16x1xf32>
    %39 = math.rsqrt %38 : vector<16x1xf32>
    %40 = vector.broadcast %39 : vector<16x1xf32> to vector<16x128xf32>
    %41 = arith.mulf %31, %40 : vector<16x128xf32>
    %c0_18 = arith.constant 0 : index
    %c0_19 = arith.constant 0 : index
    %42 = vector.load %arg7[%c0_18, %c0_19] : memref<1x128xf32, #tpu.memory_space<vmem>>, vector<1x128xf32>
    %43 = vector.broadcast %42 : vector<1x128xf32> to vector<16x128xf32>
    %44 = arith.mulf %41, %43 : vector<16x128xf32>
    %c0_20 = arith.constant 0 : index
    %c0_21 = arith.constant 0 : index
    %45 = vector.load %arg8[%c0_20, %c0_21] : memref<1x128xf32, #tpu.memory_space<vmem>>, vector<1x128xf32>
    %46 = vector.broadcast %45 : vector<1x128xf32> to vector<16x128xf32>
    %47 = arith.addf %44, %46 : vector<16x128xf32>
    %c0_22 = arith.constant 0 : index
    %c0_23 = arith.constant 0 : index
    %48 = vector.load %arg9[%c0_22, %c0_23] : memref<16x128xf32, #tpu.memory_space<vmem>>, vector<16x128xf32>
    tpu.vector_store %arg9[%c0_22, %c0_23], %47 {strides = array<i32>} : memref<16x128xf32, #tpu.memory_space<vmem>>, vector<16x128xf32>,
    return
  }
  func.func @transform_0(%arg0: i32) -> (i32, i32) {
    %c0_i32 = arith.constant 0 : i32
    %c0_i32_0 = arith.constant 0 : i32
    return %arg0, %c0_i32 : i32, i32
  }
  func.func @transform_1(%arg0: i32) -> (i32, i32) {
    %c0_i32 = arith.constant 0 : i32
    %c0_i32_0 = arith.constant 0 : i32
    return %arg0, %c0_i32 : i32, i32
  }
  func.func @transform_2(%arg0: i32) -> (i32, i32) {
    %c0_i32 = arith.constant 0 : i32
    %c0_i32_0 = arith.constant 0 : i32
    return %arg0, %c0_i32 : i32, i32
  }
  func.func @transform_3(%arg0: i32) -> (i32, i32) {
    %c0_i32 = arith.constant 0 : i32
    %c0_i32_0 = arith.constant 0 : i32
    %c0_i32_1 = arith.constant 0 : i32
    return %c0_i32, %c0_i32_0 : i32, i32
  }
  func.func @transform_4(%arg0: i32) -> (i32, i32) {
    %c0_i32 = arith.constant 0 : i32
    %c0_i32_0 = arith.constant 0 : i32
    %c0_i32_1 = arith.constant 0 : i32
    return %c0_i32, %c0_i32_0 : i32, i32
  }
  func.func @transform_5(%arg0: i32) -> (i32, i32) {
    %c0_i32 = arith.constant 0 : i32
    %c0_i32_0 = arith.constant 0 : i32
    %c0_i32_1 = arith.constant 0 : i32
    return %c0_i32, %c0_i32_0 : i32, i32
  }
  func.func @transform_6(%arg0: i32) -> (i32, i32) {
    %c0_i32 = arith.constant 0 : i32
    %c0_i32_0 = arith.constant 0 : i32
    %c0_i32_1 = arith.constant 0 : i32
    return %c0_i32, %c0_i32_0 : i32, i32
  }
  func.func @transform_7(%arg0: i32) -> (i32, i32) {
    %c0_i32 = arith.constant 0 : i32
    %c0_i32_0 = arith.constant 0 : i32
    %c0_i32_1 = arith.constant 0 : i32
    return %c0_i32, %c0_i32_0 : i32, i32
  }
  func.func @transform_8(%arg0: i32) -> (i32, i32) {
    %c0_i32 = arith.constant 0 : i32
    %c0_i32_0 = arith.constant 0 : i32
    return %arg0, %c0_i32 : i32, i32
  }
}

</mosaic_0001>

<llo_original>
// kernel: bert_embeddings.1
$region0: #{bert_embeddings.1}
  #allocation0 [shape = 'u32[]', space=smem, size = 0x4, offset = 0x4, fixed_abs, tag = 'smem constant byte address 0x4 - core index']
  #allocation1 [shape = 'u32[144,128]{1,0:T(1,128)}', space=vmem, size = 0x12000, scoped, tag = 'internal scratch']
  %s0 = inlined_call_operand.vmem [shape: s32[16,1], index: 0, kind: input, shape index: {}]
  %s1 = inlined_call_operand.vmem [shape: s32[16,1], index: 1, kind: input, shape index: {}]
  %s2 = inlined_call_operand.vmem [shape: s32[16,1], index: 2, kind: input, shape index: {}]
  %s3 = inlined_call_operand.hbm [shape: f32[512,128], index: 3, kind: input, shape index: {}]
  %s4 = inlined_call_operand.hbm [shape: f32[64,128], index: 4, kind: input, shape index: {}]
  %s5 = inlined_call_operand.vmem [shape: f32[2,128], index: 5, kind: input, shape index: {}]
  %s6 = inlined_call_operand.vmem [shape: f32[1,128], index: 6, kind: input, shape index: {}]
  %s7 = inlined_call_operand.vmem [shape: f32[1,128], index: 7, kind: input, shape index: {}]
  %s8 = inlined_call_operand.hbm [shape: f32[16,128], index: 8, kind: output, shape index: {}]
  %s9 = sld [smem:[#allocation0]]
  $region50: #{bert_embeddings.1} parent=0
    _
  %s11 = ssub.s32 1, %s9
  %s12 = scalar_select 0, %s11, %s9
  $region1: #{bert_embeddings.1} parent=0
    #allocation2 [shape = 'u8[262144]{0}', space=vmem, size = 0x40000, scoped, tag = 'input window, operand 3, single buffered']
    #allocation3 [shape = 's32[1]{0}', space=sflag, size = 0x4, scoped, tag = 'scoped memory for bert_embeddings.1']
    #allocation4 [shape = 's32[1]{0}', space=sflag, size = 0x4, scoped, tag = 'scoped memory for bert_embeddings.1']
    #allocation5 [shape = 'u8[32768]{0}', space=vmem, size = 0x8000, scoped, tag = 'input window, operand 4, single buffered']
    #allocation6 [shape = 's32[1]{0}', space=sflag, size = 0x4, scoped, tag = 'scoped memory for bert_embeddings.1']
    #allocation7 [shape = 'u8[8192]{0}', space=vmem, size = 0x2000, scoped, tag = 'output window, operand 0, single buffered']
    %13 = vsyncpa [#allocation3], 0
    %14 = vsyncpa [#allocation6], 0
    %15 = vsyncpa [#allocation4], 0
    // Predicated region
    $region2: #{bert_embeddings.1} parent=1 // pred_check
      _
    $region3: #{bert_embeddings.1} parent=1 // pred_check_branch
      %17 = sbr.rel (0) target = $region5
    $region4: #{bert_embeddings.1} parent=1 // pred_region
      _
    $region5: #{bert_embeddings.1} parent=1 // pred_fallthru
      _
    // Predicated region
    $region6: #{bert_embeddings.1} parent=1 // pred_check
      _
    $region7: #{bert_embeddings.1} parent=1 // pred_check_branch
      %19 = sbr.rel (0) target = $region9
    $region8: #{bert_embeddings.1} parent=1 // pred_region
      _
    $region9: #{bert_embeddings.1} parent=1 // pred_fallthru
      _
    // Predicated region
    $region10: #{bert_embeddings.1} parent=1 // pred_check
      _
    $region11: #{bert_embeddings.1} parent=1 // pred_check_branch
      %21 = sbr.rel (0) target = $region13
    $region12: #{bert_embeddings.1} parent=1 // pred_region
      _
    $region13: #{bert_embeddings.1} parent=1 // pred_fallthru
      _
    // Predicated region
    $region14: #{bert_embeddings.1} parent=1 // pred_check
      _
    $region15: #{bert_embeddings.1} parent=1 // pred_check_branch
      %23 = sbr.rel (0) target = $region17
    $region16: #{bert_embeddings.1} parent=1 // pred_region
      %s25 = ssub.s32 8192, 8192
      %26 = vsyncadd [#allocation3], %s25
      %s27 = sshll.u32 [#allocation2], 4
      %s28 = int_to_ptr.vmem [resolvable:$true] %s27
      %33 = dma.hbm_to_vmem [thread:$0]  %s3, 8192, %s28, [#allocation3], 128, 128, 8
    $region17: #{bert_embeddings.1} parent=1 // pred_fallthru
      _
    // Predicated region
    $region18: #{bert_embeddings.1} parent=1 // pred_check
      _
    $region19: #{bert_embeddings.1} parent=1 // pred_check_branch
      %35 = sbr.rel (0) target = $region21
    $region20: #{bert_embeddings.1} parent=1 // pred_region
      %s37 = ssub.s32 1024, 1024
      %38 = vsyncadd [#allocation6], %s37
      %s39 = sshll.u32 [#allocation5], 4
      %s40 = int_to_ptr.vmem [resolvable:$true] %s39
      %45 = dma.hbm_to_vmem [thread:$0]  %s4, 1024, %s40, [#allocation6], 128, 128, 8
    $region21: #{bert_embeddings.1} parent=1 // pred_fallthru
      _
    // Predicated region
    $region22: #{bert_embeddings.1} parent=1 // pred_check
      _
    $region23: #{bert_embeddings.1} parent=1 // pred_check_branch
      %47 = sbr.rel (0) target = $region25
    $region24: #{bert_embeddings.1} parent=1 // pred_region
      _
    $region25: #{bert_embeddings.1} parent=1 // pred_fallthru
      _
    // Predicated region
    $region26: #{bert_embeddings.1} parent=1 // pred_check
      _
    $region27: #{bert_embeddings.1} parent=1 // pred_check_branch
      %49 = sbr.rel (0) target = $region29
    $region28: #{bert_embeddings.1} parent=1 // pred_region
      _
    $region29: #{bert_embeddings.1} parent=1 // pred_fallthru
      _
    // Predicated region
    $region30: #{bert_embeddings.1} parent=1 // pred_check
      _
    $region31: #{bert_embeddings.1} parent=1 // pred_check_branch
      %51 = sbr.rel (0) target = $region33
    $region32: #{bert_embeddings.1} parent=1 // pred_region
      _
    $region33: #{bert_embeddings.1} parent=1 // pred_fallthru
      _
    // Predicated region
    $region34: #{bert_embeddings.1} parent=1 // pred_check
      _
    $region35: #{bert_embeddings.1} parent=1 // pred_check_branch
      %53 = sbr.rel (0) target = $region37
    $region36: #{bert_embeddings.1} parent=1 // pred_region
      %54 = dma.done [#allocation3], 8192
    $region37: #{bert_embeddings.1} parent=1 // pred_fallthru
      _
    // Predicated region
    $region38: #{bert_embeddings.1} parent=1 // pred_check
      _
    $region39: #{bert_embeddings.1} parent=1 // pred_check_branch
      %56 = sbr.rel (0) target = $region41
    $region40: #{bert_embeddings.1} parent=1 // pred_region
      %57 = dma.done [#allocation6], 1024
    $region41: #{bert_embeddings.1} parent=1 // pred_fallthru
      _
    %v58 = vld [vmem:[%s0] sm:$0xff]
    %v59 = vld [vmem:[%s0 + $0x8] sm:$0xff]
    %v60 = vlaneseq
    %v61 = vand.u32 %v60, 127
    %v62 = vadd.s32 %v61, 128
    %v63 = vadd.s32 %v61, 256
    %v64 = vadd.s32 %v61, 384
    %65 = vset.pattern.permute.xlu0 0
    %66 = vperm.xlu0 %65, %v58
    %v67 = vpop.permute.xlu0 %66
    %68 = vset.pattern.permute.xlu0 0
    %69 = vperm.xlu0 %68, %v59
    %v70 = vpop.permute.xlu0 %69
    %vm71 = vcmp.eq.s32.totalorder %v67, %v61
    %vm72 = vcmp.eq.s32.totalorder %v67, %v62
    %vm73 = vcmp.eq.s32.totalorder %v67, %v63
    %vm74 = vcmp.eq.s32.totalorder %v67, %v64
    %vm75 = vcmp.eq.s32.totalorder %v70, %v61
    %vm76 = vcmp.eq.s32.totalorder %v70, %v62
    %vm77 = vcmp.eq.s32.totalorder %v70, %v63
    %vm78 = vcmp.eq.s32.totalorder %v70, %v64
    %v79 = vsel %vm71, 1, 0
    %v80 = vsel %vm72, 1, 0
    %v81 = vsel %vm73, 1, 0
    %v82 = vsel %vm74, 1, 0
    %v83 = vsel %vm75, 1, 0
    %v84 = vsel %vm76, 1, 0
    %v85 = vsel %vm77, 1, 0
    %v86 = vsel %vm78, 1, 0
    %v87 = vcvt.s32.f32 %v79
    %v88 = vcvt.s32.f32 %v80
    %v89 = vcvt.s32.f32 %v81
    %v90 = vcvt.s32.f32 %v82
    %v91 = vcvt.s32.f32 %v83
    %v92 = vcvt.s32.f32 %v84
    %v93 = vcvt.s32.f32 %v85
    %v94 = vcvt.s32.f32 %v86
    %v95 = vld [vmem:[#allocation2] sm:$0xff]
    %v96 = vld [vmem:[#allocation2 + $0x8] sm:$0xff]
    %v97 = vld [vmem:[#allocation2 + $0x10] sm:$0xff]
    %v98 = vld [vmem:[#allocation2 + $0x18] sm:$0xff]
    %v99 = vld [vmem:[#allocation2 + $0x20] sm:$0xff]
    %v100 = vld [vmem:[#allocation2 + $0x28] sm:$0xff]
    %v101 = vld [vmem:[#allocation2 + $0x30] sm:$0xff]
    %v102 = vld [vmem:[#allocation2 + $0x38] sm:$0xff]
    %v103 = vld [vmem:[#allocation2 + $0x40] sm:$0xff]
    %v104 = vld [vmem:[#allocation2 + $0x48] sm:$0xff]
    %v105 = vld [vmem:[#allocation2 + $0x50] sm:$0xff]
    %v106 = vld [vmem:[#allocation2 + $0x58] sm:$0xff]
    %v107 = vld [vmem:[#allocation2 + $0x60] sm:$0xff]
    %v108 = vld [vmem:[#allocation2 + $0x68] sm:$0xff]
    %v109 = vld [vmem:[#allocation2 + $0x70] sm:$0xff]
    %v110 = vld [vmem:[#allocation2 + $0x78] sm:$0xff]
    %v111 = vld [vmem:[#allocation2 + $0x80] sm:$0xff]
    %v112 = vld [vmem:[#allocation2 + $0x88] sm:$0xff]
    %v113 = vld [vmem:[#allocation2 + $0x90] sm:$0xff]
    %v114 = vld [vmem:[#allocation2 + $0x98] sm:$0xff]
    %v115 = vld [vmem:[#allocation2 + $0xa0] sm:$0xff]
    %v116 = vld [vmem:[#allocation2 + $0xa8] sm:$0xff]
    %v117 = vld [vmem:[#allocation2 + $0xb0] sm:$0xff]
    %v118 = vld [vmem:[#allocation2 + $0xb8] sm:$0xff]
    %v119 = vld [vmem:[#allocation2 + $0xc0] sm:$0xff]
    %v120 = vld [vmem:[#allocation2 + $0xc8] sm:$0xff]
    %v121 = vld [vmem:[#allocation2 + $0xd0] sm:$0xff]
    %v122 = vld [vmem:[#allocation2 + $0xd8] sm:$0xff]
    %v123 = vld [vmem:[#allocation2 + $0xe0] sm:$0xff]
    %v124 = vld [vmem:[#allocation2 + $0xe8] sm:$0xff]
    %v125 = vld [vmem:[#allocation2 + $0xf0] sm:$0xff]
    %v126 = vld [vmem:[#allocation2 + $0xf8] sm:$0xff]
    %v127 = vld [vmem:[#allocation2 + $0x100] sm:$0xff]
    %v128 = vld [vmem:[#allocation2 + $0x108] sm:$0xff]
    %v129 = vld [vmem:[#allocation2 + $0x110] sm:$0xff]
    %v130 = vld [vmem:[#allocation2 + $0x118] sm:$0xff]
    %v131 = vld [vmem:[#allocation2 + $0x120] sm:$0xff]
    %v132 = vld [vmem:[#allocation2 + $0x128] sm:$0xff]
    %v133 = vld [vmem:[#allocation2 + $0x130] sm:$0xff]
    %v134 = vld [vmem:[#allocation2 + $0x138] sm:$0xff]
    %v135 = vld [vmem:[#allocation2 + $0x140] sm:$0xff]
    %v136 = vld [vmem:[#allocation2 + $0x148] sm:$0xff]
    %v137 = vld [vmem:[#allocation2 + $0x150] sm:$0xff]
    %v138 = vld [vmem:[#allocation2 + $0x158] sm:$0xff]
    %v139 = vld [vmem:[#allocation2 + $0x160] sm:$0xff]
    %v140 = vld [vmem:[#allocation2 + $0x168] sm:$0xff]
    %v141 = vld [vmem:[#allocation2 + $0x170] sm:$0xff]
    %v142 = vld [vmem:[#allocation2 + $0x178] sm:$0xff]
    %v143 = vld [vmem:[#allocation2 + $0x180] sm:$0xff]
    %v144 = vld [vmem:[#allocation2 + $0x188] sm:$0xff]
    %v145 = vld [vmem:[#allocation2 + $0x190] sm:$0xff]
    %v146 = vld [vmem:[#allocation2 + $0x198] sm:$0xff]
    %v147 = vld [vmem:[#allocation2 + $0x1a0] sm:$0xff]
    %v148 = vld [vmem:[#allocation2 + $0x1a8] sm:$0xff]
    %v149 = vld [vmem:[#allocation2 + $0x1b0] sm:$0xff]
    %v150 = vld [vmem:[#allocation2 + $0x1b8] sm:$0xff]
    %v151 = vld [vmem:[#allocation2 + $0x1c0] sm:$0xff]
    %v152 = vld [vmem:[#allocation2 + $0x1c8] sm:$0xff]
    %v153 = vld [vmem:[#allocation2 + $0x1d0] sm:$0xff]
    %v154 = vld [vmem:[#allocation2 + $0x1d8] sm:$0xff]
    %v155 = vld [vmem:[#allocation2 + $0x1e0] sm:$0xff]
    %v156 = vld [vmem:[#allocation2 + $0x1e8] sm:$0xff]
    %v157 = vld [vmem:[#allocation2 + $0x1f0] sm:$0xff]
    %v158 = vld [vmem:[#allocation2 + $0x1f8] sm:$0xff]
    %v159 = vld [vmem:[%s1] sm:$0xff]
    %v160 = vld [vmem:[%s1 + $0x8] sm:$0xff]
    %161 = vset.pattern.permute.xlu0 0
    %162 = vperm.xlu0 %161, %v159
    %v163 = vpop.permute.xlu0 %162
    %164 = vset.pattern.permute.xlu0 0
    %165 = vperm.xlu0 %164, %v160
    %v166 = vpop.permute.xlu0 %165
    %vm167 = vcmp.eq.s32.totalorder %v163, %v61
    %vm168 = vcmp.eq.s32.totalorder %v166, %v61
    %v169 = vsel %vm167, 1, 0
    %v170 = vsel %vm168, 1, 0
    %v171 = vcvt.s32.f32 %v169
    %v172 = vcvt.s32.f32 %v170
    %v173 = vld [vmem:[#allocation5] sm:$0xff]
    %v174 = vld [vmem:[#allocation5 + $0x8] sm:$0xff]
    %v175 = vld [vmem:[#allocation5 + $0x10] sm:$0xff]
    %v176 = vld [vmem:[#allocation5 + $0x18] sm:$0xff]
    %v177 = vld [vmem:[#allocation5 + $0x20] sm:$0xff]
    %v178 = vld [vmem:[#allocation5 + $0x28] sm:$0xff]
    %v179 = vld [vmem:[#allocation5 + $0x30] sm:$0xff]
    %v180 = vld [vmem:[#allocation5 + $0x38] sm:$0xff]
    %vm181 = vcmask 523264
    %v183 = vsel %vm181, %v171, 0
    %v186 = vsel %vm181, %v172, 0
    %188 = vmatprep.subr.mxu0 0.0
    %189 = vmatpush1.msra.mxu0 0.0
    %190 = vmatprep.subr.mxu0 0.0
    %191 = vmatpush1.msra.mxu0 0.0
    %192 = vmatprep.subr.mxu0 0.0
    %193 = vmatpush1.msra.mxu0 0.0
    %194 = vmatprep.subr.mxu0 0.0
    %195 = vmatpush1.msra.mxu0 0.0
    %196 = vmatprep.subr.mxu0 0.0
    %197 = vmatpush1.msra.mxu0 0.0
    %198 = vmatprep.subr.mxu0 0.0
    %199 = vmatpush1.msra.mxu0 0.0
    %200 = vmatprep.subr.mxu0 0.0
    %201 = vmatpush1.msra.mxu0 0.0
    %202 = vmatprep.subr.mxu0 0.0
    %203 = vmatpush1.msra.mxu0 0.0
    %204 = vmatprep.subr.mxu0 0.0
    %205 = vmatpush1.msra.mxu0 %v180
    %206 = vmatprep.subr.mxu0 0.0
    %207 = vmatpush1.msra.mxu0 %v179
    %208 = vmatprep.subr.mxu0 0.0
    %209 = vmatpush1.msra.mxu0 %v178
    %210 = vmatprep.subr.mxu0 0.0
    %211 = vmatpush1.msra.mxu0 %v177
    %212 = vmatprep.subr.mxu0 0.0
    %213 = vmatpush1.msra.mxu0 %v176
    %214 = vmatprep.subr.mxu0 0.0
    %215 = vmatpush1.msra.mxu0 %v175
    %216 = vmatprep.subr.mxu0 0.0
    %217 = vmatpush1.msra.mxu0 %v174
    %218 = vmatprep.subr.mxu0 0.0
    %219 = vmatpush1.msra.mxu0 %v173
    %220 = vmatprep.subr.mxu0 0.0
    %221 = vmatpush2.msra.mxu0 0.0
    %222 = vmatprep.subr.mxu0 0.0
    %223 = vmatpush2.msra.mxu0 0.0
    %224 = vmatprep.subr.mxu0 0.0
    %225 = vmatpush2.msra.mxu0 0.0
    %226 = vmatprep.subr.mxu0 0.0
    %227 = vmatpush2.msra.mxu0 0.0
    %228 = vmatprep.subr.mxu0 0.0
    %229 = vmatpush2.msra.mxu0 0.0
    %230 = vmatprep.subr.mxu0 0.0
    %231 = vmatpush2.msra.mxu0 0.0
    %232 = vmatprep.subr.mxu0 0.0
    %233 = vmatpush2.msra.mxu0 0.0
    %234 = vmatprep.subr.mxu0 0.0
    %235 = vmatpush2.msra.mxu0 0.0
    %236 = vmatprep.subr.mxu0 0.0
    %237 = vmatpush2.msra.mxu0 0.0
    %238 = vmatprep.subr.mxu0 0.0
    %239 = vmatpush2.msra.mxu0 0.0
    %240 = vmatprep.subr.mxu0 0.0
    %241 = vmatpush2.msra.mxu0 0.0
    %242 = vmatprep.subr.mxu0 0.0
    %243 = vmatpush2.msra.mxu0 0.0
    %244 = vmatprep.subr.mxu0 0.0
    %245 = vmatpush2.msra.mxu0 0.0
    %246 = vmatprep.subr.mxu0 0.0
    %247 = vmatpush2.msra.mxu0 0.0
    %248 = vmatprep.subr.mxu0 0.0
    %249 = vmatpush2.msra.mxu0 0.0
    %250 = vmatprep.subr.mxu0 0.0
    %251 = vmatpush2.msra.mxu0 0.0
    %252 = vmatprep.mubr.f32.mxu0 0.0
    %253 = vmatmul.mubr.f32.gmra.mxu0 %v183
    %v254 = vpop.f32.mrf.mxu0
    %v255 = vadd.f32 0.0, %v254
    %v256 = vpop.f32.mrf.mxu0
    %257 = vmatprep.mubr.f32.mxu0 0.0
    %258 = vmatmul.mubr.f32.gmra.mxu0 %v186
    %v259 = vpop.f32.mrf.mxu0
    %v260 = vadd.f32 0.0, %v259
    %v261 = vpop.f32.mrf.mxu0
    %262 = vdwg.mxu0
    %263 = vmatprep.subr.mxu0 0.0
    %264 = vmatpush1.msra.mxu0 %v110
    %265 = vmatprep.subr.mxu0 0.0
    %266 = vmatpush1.msra.mxu0 %v109
    %267 = vmatprep.subr.mxu0 0.0
    %268 = vmatpush1.msra.mxu0 %v108
    %269 = vmatprep.subr.mxu0 0.0
    %270 = vmatpush1.msra.mxu0 %v107
    %271 = vmatprep.subr.mxu0 0.0
    %272 = vmatpush1.msra.mxu0 %v106
    %273 = vmatprep.subr.mxu0 0.0
    %274 = vmatpush1.msra.mxu0 %v105
    %275 = vmatprep.subr.mxu0 0.0
    %276 = vmatpush1.msra.mxu0 %v104
    %277 = vmatprep.subr.mxu0 0.0
    %278 = vmatpush1.msra.mxu0 %v103
    %279 = vmatprep.subr.mxu0 0.0
    %280 = vmatpush1.msra.mxu0 %v102
    %281 = vmatprep.subr.mxu0 0.0
    %282 = vmatpush1.msra.mxu0 %v101
    %283 = vmatprep.subr.mxu0 0.0
    %284 = vmatpush1.msra.mxu0 %v100
    %285 = vmatprep.subr.mxu0 0.0
    %286 = vmatpush1.msra.mxu0 %v99
    %287 = vmatprep.subr.mxu0 0.0
    %288 = vmatpush1.msra.mxu0 %v98
    %289 = vmatprep.subr.mxu0 0.0
    %290 = vmatpush1.msra.mxu0 %v97
    %291 = vmatprep.subr.mxu0 0.0
    %292 = vmatpush1.msra.mxu0 %v96
    %293 = vmatprep.subr.mxu0 0.0
    %294 = vmatpush1.msra.mxu0 %v95
    %295 = vmatprep.subr.mxu0 0.0
    %296 = vmatpush2.msra.mxu0 %v126
    %297 = vmatprep.subr.mxu0 0.0
    %298 = vmatpush2.msra.mxu0 %v125
    %299 = vmatprep.subr.mxu0 0.0
    %300 = vmatpush2.msra.mxu0 %v124
    %301 = vmatprep.subr.mxu0 0.0
    %302 = vmatpush2.msra.mxu0 %v123
    %303 = vmatprep.subr.mxu0 0.0
    %304 = vmatpush2.msra.mxu0 %v122
    %305 = vmatprep.subr.mxu0 0.0
    %306 = vmatpush2.msra.mxu0 %v121
    %307 = vmatprep.subr.mxu0 0.0
    %308 = vmatpush2.msra.mxu0 %v120
    %309 = vmatprep.subr.mxu0 0.0
    %310 = vmatpush2.msra.mxu0 %v119
    %311 = vmatprep.subr.mxu0 0.0
    %312 = vmatpush2.msra.mxu0 %v118
    %313 = vmatprep.subr.mxu0 0.0
    %314 = vmatpush2.msra.mxu0 %v117
    %315 = vmatprep.subr.mxu0 0.0
    %316 = vmatpush2.msra.mxu0 %v116
    %317 = vmatprep.subr.mxu0 0.0
    %318 = vmatpush2.msra.mxu0 %v115
    %319 = vmatprep.subr.mxu0 0.0
    %320 = vmatpush2.msra.mxu0 %v114
    %321 = vmatprep.subr.mxu0 0.0
    %322 = vmatpush2.msra.mxu0 %v113
    %323 = vmatprep.subr.mxu0 0.0
    %324 = vmatpush2.msra.mxu0 %v112
    %325 = vmatprep.subr.mxu0 0.0
    %326 = vmatpush2.msra.mxu0 %v111
    %327 = vmatprep.mubr.f32.mxu0 %v88
    %328 = vmatmul.mubr.f32.gmra.mxu0 %v87
    %v329 = vpop.f32.mrf.mxu0
    %v330 = vadd.f32 %v255, %v329
    %v331 = vpop.f32.mrf.mxu0
    %332 = vmatprep.mubr.f32.mxu0 %v92
    %333 = vmatmul.mubr.f32.gmra.mxu0 %v91
    %v334 = vpop.f32.mrf.mxu0
    %v335 = vadd.f32 %v260, %v334
    %v336 = vpop.f32.mrf.mxu0
    %337 = vdwg.mxu0
    %338 = vmatprep.subr.mxu0 0.0
    %339 = vmatpush1.msra.mxu0 %v142
    %340 = vmatprep.subr.mxu0 0.0
    %341 = vmatpush1.msra.mxu0 %v141
    %342 = vmatprep.subr.mxu0 0.0
    %343 = vmatpush1.msra.mxu0 %v140
    %344 = vmatprep.subr.mxu0 0.0
    %345 = vmatpush1.msra.mxu0 %v139
    %346 = vmatprep.subr.mxu0 0.0
    %347 = vmatpush1.msra.mxu0 %v138
    %348 = vmatprep.subr.mxu0 0.0
    %349 = vmatpush1.msra.mxu0 %v137
    %350 = vmatprep.subr.mxu0 0.0
    %351 = vmatpush1.msra.mxu0 %v136
    %352 = vmatprep.subr.mxu0 0.0
    %353 = vmatpush1.msra.mxu0 %v135
    %354 = vmatprep.subr.mxu0 0.0
    %355 = vmatpush1.msra.mxu0 %v134
    %356 = vmatprep.subr.mxu0 0.0
    %357 = vmatpush1.msra.mxu0 %v133
    %358 = vmatprep.subr.mxu0 0.0
    %359 = vmatpush1.msra.mxu0 %v132
    %360 = vmatprep.subr.mxu0 0.0
    %361 = vmatpush1.msra.mxu0 %v131
    %362 = vmatprep.subr.mxu0 0.0
    %363 = vmatpush1.msra.mxu0 %v130
    %364 = vmatprep.subr.mxu0 0.0
    %365 = vmatpush1.msra.mxu0 %v129
    %366 = vmatprep.subr.mxu0 0.0
    %367 = vmatpush1.msra.mxu0 %v128
    %368 = vmatprep.subr.mxu0 0.0
    %369 = vmatpush1.msra.mxu0 %v127
    %370 = vmatprep.subr.mxu0 0.0
    %371 = vmatpush2.msra.mxu0 %v158
    %372 = vmatprep.subr.mxu0 0.0
    %373 = vmatpush2.msra.mxu0 %v157
    %374 = vmatprep.subr.mxu0 0.0
    %375 = vmatpush2.msra.mxu0 %v156
    %376 = vmatprep.subr.mxu0 0.0
    %377 = vmatpush2.msra.mxu0 %v155
    %378 = vmatprep.subr.mxu0 0.0
    %379 = vmatpush2.msra.mxu0 %v154
    %380 = vmatprep.subr.mxu0 0.0
    %381 = vmatpush2.msra.mxu0 %v153
    %382 = vmatprep.subr.mxu0 0.0
    %383 = vmatpush2.msra.mxu0 %v152
    %384 = vmatprep.subr.mxu0 0.0
    %385 = vmatpush2.msra.mxu0 %v151
    %386 = vmatprep.subr.mxu0 0.0
    %387 = vmatpush2.msra.mxu0 %v150
    %388 = vmatprep.subr.mxu0 0.0
    %389 = vmatpush2.msra.mxu0 %v149
    %390 = vmatprep.subr.mxu0 0.0
    %391 = vmatpush2.msra.mxu0 %v148
    %392 = vmatprep.subr.mxu0 0.0
    %393 = vmatpush2.msra.mxu0 %v147
    %394 = vmatprep.subr.mxu0 0.0
    %395 = vmatpush2.msra.mxu0 %v146
    %396 = vmatprep.subr.mxu0 0.0
    %397 = vmatpush2.msra.mxu0 %v145
    %398 = vmatprep.subr.mxu0 0.0
    %399 = vmatpush2.msra.mxu0 %v144
    %400 = vmatprep.subr.mxu0 0.0
    %401 = vmatpush2.msra.mxu0 %v143
    %402 = vmatprep.mubr.f32.mxu0 %v90
    %403 = vmatmul.mubr.f32.gmra.mxu0 %v89
    %v404 = vpop.f32.mrf.mxu0
    %v405 = vadd.f32 %v330, %v404
    %v406 = vpop.f32.mrf.mxu0
    %407 = vmatprep.mubr.f32.mxu0 %v94
    %408 = vmatmul.mubr.f32.gmra.mxu0 %v93
    %v409 = vpop.f32.mrf.mxu0
    %v410 = vadd.f32 %v335, %v409
    %v411 = vpop.f32.mrf.mxu0
    %412 = vdwg.mxu0
    %v413 = vld [vmem:[%s2] sm:$0xff]
    %v414 = vld [vmem:[%s2 + $0x8] sm:$0xff]
    %415 = vset.pattern.permute.xlu0 0
    %416 = vperm.xlu0 %415, %v413
    %v417 = vpop.permute.xlu0 %416
    %418 = vset.pattern.permute.xlu0 0
    %419 = vperm.xlu0 %418, %v414
    %v420 = vpop.permute.xlu0 %419
    %vm421 = vcmp.eq.s32.totalorder %v417, %v61
    %vm422 = vcmp.eq.s32.totalorder %v420, %v61
    %v423 = vsel %vm421, 1, 0
    %v424 = vsel %vm422, 1, 0
    %v425 = vcvt.s32.f32 %v423
    %v426 = vcvt.s32.f32 %v424
    %v427 = vld [vmem:[%s5] sm:$0x3]
    %vm428 = vcmask 15360
    %v430 = vsel %vm428, %v425, 0
    %v433 = vsel %vm428, %v426, 0
    %vm435 = vcmask 1041408
    %v437 = vsel %vm435, %v427, 0
    %439 = vmatprep.subr.mxu0 0.0
    %440 = vmatpush1.msra.mxu0 0.0
    %441 = vmatprep.subr.mxu0 0.0
    %442 = vmatpush1.msra.mxu0 0.0
    %443 = vmatprep.subr.mxu0 0.0
    %444 = vmatpush1.msra.mxu0 0.0
    %445 = vmatprep.subr.mxu0 0.0
    %446 = vmatpush1.msra.mxu0 0.0
    %447 = vmatprep.subr.mxu0 0.0
    %448 = vmatpush1.msra.mxu0 0.0
    %449 = vmatprep.subr.mxu0 0.0
    %450 = vmatpush1.msra.mxu0 0.0
    %451 = vmatprep.subr.mxu0 0.0
    %452 = vmatpush1.msra.mxu0 0.0
    %453 = vmatprep.subr.mxu0 0.0
    %454 = vmatpush1.msra.mxu0 0.0
    %455 = vmatprep.subr.mxu0 0.0
    %456 = vmatpush1.msra.mxu0 0.0
    %457 = vmatprep.subr.mxu0 0.0
    %458 = vmatpush1.msra.mxu0 0.0
    %459 = vmatprep.subr.mxu0 0.0
    %460 = vmatpush1.msra.mxu0 0.0
    %461 = vmatprep.subr.mxu0 0.0
    %462 = vmatpush1.msra.mxu0 0.0
    %463 = vmatprep.subr.mxu0 0.0
    %464 = vmatpush1.msra.mxu0 0.0
    %465 = vmatprep.subr.mxu0 0.0
    %466 = vmatpush1.msra.mxu0 0.0
    %467 = vmatprep.subr.mxu0 0.0
    %468 = vmatpush1.msra.mxu0 0.0
    %469 = vmatprep.subr.mxu0 0.0
    %470 = vmatpush1.msra.mxu0 %v437
    %471 = vmatprep.subr.mxu0 0.0
    %472 = vmatpush2.msra.mxu0 0.0
    %473 = vmatprep.subr.mxu0 0.0
    %474 = vmatpush2.msra.mxu0 0.0
    %475 = vmatprep.subr.mxu0 0.0
    %476 = vmatpush2.msra.mxu0 0.0
    %477 = vmatprep.subr.mxu0 0.0
    %478 = vmatpush2.msra.mxu0 0.0
    %479 = vmatprep.subr.mxu0 0.0
    %480 = vmatpush2.msra.mxu0 0.0
    %481 = vmatprep.subr.mxu0 0.0
    %482 = vmatpush2.msra.mxu0 0.0
    %483 = vmatprep.subr.mxu0 0.0
    %484 = vmatpush2.msra.mxu0 0.0
    %485 = vmatprep.subr.mxu0 0.0
    %486 = vmatpush2.msra.mxu0 0.0
    %487 = vmatprep.subr.mxu0 0.0
    %488 = vmatpush2.msra.mxu0 0.0
    %489 = vmatprep.subr.mxu0 0.0
    %490 = vmatpush2.msra.mxu0 0.0
    %491 = vmatprep.subr.mxu0 0.0
    %492 = vmatpush2.msra.mxu0 0.0
    %493 = vmatprep.subr.mxu0 0.0
    %494 = vmatpush2.msra.mxu0 0.0
    %495 = vmatprep.subr.mxu0 0.0
    %496 = vmatpush2.msra.mxu0 0.0
    %497 = vmatprep.subr.mxu0 0.0
    %498 = vmatpush2.msra.mxu0 0.0
    %499 = vmatprep.subr.mxu0 0.0
    %500 = vmatpush2.msra.mxu0 0.0
    %501 = vmatprep.subr.mxu0 0.0
    %502 = vmatpush2.msra.mxu0 0.0
    %503 = vmatprep.mubr.f32.mxu0 0.0
    %504 = vmatmul.mubr.f32.gmra.mxu0 %v430
    %v505 = vpop.f32.mrf.mxu0
    %v506 = vadd.f32 0.0, %v505
    %v507 = vpop.f32.mrf.mxu0
    %508 = vmatprep.mubr.f32.mxu0 0.0
    %509 = vmatmul.mubr.f32.gmra.mxu0 %v433
    %v510 = vpop.f32.mrf.mxu0
    %v511 = vadd.f32 0.0, %v510
    %v512 = vpop.f32.mrf.mxu0
    %513 = vdwg.mxu0
    %v514 = vadd.f32 %v405, %v506
    %v515 = vadd.f32 %v410, %v511
    %516 = vadd.xlane.f32.xlu0 %v514
    %v517 = vpop.xlane.xlu0 %516
    %518 = vadd.xlane.f32.xlu0 %v515
    %v519 = vpop.xlane.xlu0 %518
    %v520 = vrcp.pop 128.0
    %v521 = vmul.f32 %v517, %v520
    %v522 = vmul.f32 %v519, %v520
    %v523 = vsub.f32 %v514, %v521
    %v524 = vsub.f32 %v515, %v522
    %v525 = vmul.f32 %v523, %v523
    %v526 = vmul.f32 %v524, %v524
    %527 = vadd.xlane.f32.xlu0 %v525
    %v528 = vpop.xlane.xlu0 %527
    %529 = vadd.xlane.f32.xlu0 %v526
    %v530 = vpop.xlane.xlu0 %529
    %v531 = vmul.f32 %v528, %v520
    %v532 = vmul.f32 %v530, %v520
    %v533 = vadd.f32 %v531, 1e-12
    %v534 = vadd.f32 %v532, 1e-12
    %v535 = vrsqrt.pop %v533
    %v536 = vrsqrt.pop %v534
    %v537 = vmul.f32 %v523, %v535
    %v538 = vmul.f32 %v524, %v536
    %v539 = vld [vmem:[%s6] sm:$0x1]
    %v541 = vlaneseq
    %v542 = vshrl.u32 %v541, 7
    %v543 = vsub.s32 0, %v542
    %v544 = vrot.slane %v539, %v543
    %v546 = vmul.f32 %v537, %v544
    %v547 = vmul.f32 %v538, %v544
    %v548 = vld [vmem:[%s7] sm:$0x1]
    %v550 = vlaneseq
    %v551 = vshrl.u32 %v550, 7
    %v552 = vsub.s32 0, %v551
    %v553 = vrot.slane %v548, %v552
    %v555 = vadd.f32 %v546, %v553
    %v556 = vadd.f32 %v547, %v553
    %557 = vst [vmem:[#allocation7] sm:$0xff] %v555
    %558 = vst [vmem:[#allocation7 + $0x8] sm:$0xff] %v556
    // Predicated region
    $region42: #{bert_embeddings.1} parent=1 // pred_check
      _
    $region43: #{bert_embeddings.1} parent=1 // pred_check_branch
      %560 = sbr.rel (0) target = $region45
    $region44: #{bert_embeddings.1} parent=1 // pred_region
      %s562 = ssub.s32 256, 256
      %563 = vsyncadd [#allocation4], %s562
      %s564 = sshll.u32 [#allocation7], 4
      %s565 = int_to_ptr.vmem [resolvable:$true] %s564
      %570 = dma.vmem_to_hbm [thread:$0]  %s565, 256, %s8, [#allocation4], 128, 128, 8
    $region45: #{bert_embeddings.1} parent=1 // pred_fallthru
      _
    // Predicated region
    $region46: #{bert_embeddings.1} parent=1 // pred_check
      _
    $region47: #{bert_embeddings.1} parent=1 // pred_check_branch
      %572 = sbr.rel (0) target = $region49
    $region48: #{bert_embeddings.1} parent=1 // pred_region
      %573 = dma.done [#allocation4], 256
    $region49: #{bert_embeddings.1} parent=1 // pred_fallthru
      _
    %574 = vsyncpa [#allocation3], 1
    %575 = vsyncpa [#allocation6], 1
    %576 = vsyncpa [#allocation4], 1

</llo_original>
